<compile_context>
chip_gen: v5e
topology: v5e:2x2
jax: 0.10.0
libtpu: 0.0.40
codegen_flags: <defaults>
</compile_context>

<pallas_src>
import jax
import jax.numpy as jnp
from jax.experimental import pallas as pl
from jax.experimental.pallas import tpu as pltpu

# ---- model hyper-parameters (from the PyTorch module) ----------------------
BLOCK_SIZE = 8
HEAD_SIZE = 8
N_EMBD = 32
NUM_HEADS = 4
VOCAB_SIZE = 65


def _make_lm_kernel(B, T):
    scale = float(HEAD_SIZE) ** -0.5

    def lm_kernel(ids_ref,                    # SMEM (B, T) int32   [scalar prefetch]
                  tok_ref, pos_ref,           # VMEM (V, E), (BLOCK_SIZE, E)
                  xh_ref,                     # VMEM (H, 1, E)  per-head noise (== torch.randn((1,1,32)))
                  wq_ref, wk_ref, wv_ref,     # VMEM (H, E, HS)
                  wll_ref, bll_ref,           # VMEM (H, HS, V), (1, V)
                  emb_ref, logits_ref):       # VMEM (B*T, E), (1, V)
        # ---- token embedding gather + positional add (scalar-indexed rows) ----
        for b in range(B):
            for t in range(T):
                idx = ids_ref[b, t]
                emb_ref[pl.ds(b * T + t, 1), :] = (
                    tok_ref[pl.ds(idx, 1), :] + pos_ref[pl.ds(t, 1), :])

        # ---- multi-head attention on per-head noise (batched over heads) ------
        x = xh_ref[...]                                                    # (H, 1, E)
        q = jnp.einsum('hte,hef->htf', x, wq_ref[...],
                       preferred_element_type=jnp.float32)                 # (H, 1, HS)
        k = jnp.einsum('hte,hef->htf', x, wk_ref[...],
                       preferred_element_type=jnp.float32)                 # (H, 1, HS)
        v = jnp.einsum('hte,hef->htf', x, wv_ref[...],
                       preferred_element_type=jnp.float32)                 # (H, 1, HS)

        # q @ k^T for T == 1 is a lane reduce (no MXU push needed)
        wei = jnp.sum(q * k, axis=-1, keepdims=True) * scale               # (H, 1, 1)
        # masked_fill(tril[:1,:1] == 0, -inf) is a no-op for T == 1
        m = jnp.max(wei, axis=-1, keepdims=True)
        e = jnp.exp(wei - m)                                               # one EUP push for all heads
        p = e / jnp.sum(e, axis=-1, keepdims=True)                         # softmax over size-1 axis -> 1.0
        head_out = p * v                                                   # (H, 1, HS)

        # head concat folded into the output projection: Wll viewed as (H, HS, V)
        partial = jnp.einsum('htf,hfv->htv', head_out, wll_ref[...],
                             preferred_element_type=jnp.float32)           # (H, 1, V)
        logits_ref[...] = jnp.sum(partial, axis=0) + bll_ref[...]          # (1, V)

    return lm_kernel


def language_model_forward(ids, params, head_noise):
    B, T = ids.shape
    V, E = params["tok_emb"].shape
    # fold head-concat into the projection weight host-side: (E, V) -> (H, HS, V)
    wll3 = params["Wll"].reshape(NUM_HEADS, HEAD_SIZE, V)
    xh = head_noise.reshape(NUM_HEADS, 1, N_EMBD)

    emb2d, logits = pl.pallas_call(
        _make_lm_kernel(B, T),
        out_shape=(
            jax.ShapeDtypeStruct((B * T, E), jnp.float32),
            jax.ShapeDtypeStruct((1, V), jnp.float32),
        ),
        grid_spec=pltpu.PrefetchScalarGridSpec(
            num_scalar_prefetch=1,                       # ids -> SMEM
            grid=(1,),
            in_specs=[
                pl.BlockSpec((V, E), lambda i, ids: (0, 0)),
                pl.BlockSpec((BLOCK_SIZE, E), lambda i, ids: (0, 0)),
                pl.BlockSpec((NUM_HEADS, 1, E), lambda i, ids: (0, 0, 0)),
                pl.BlockSpec((NUM_HEADS, E, HEAD_SIZE), lambda i, ids: (0, 0, 0)),
                pl.BlockSpec((NUM_HEADS, E, HEAD_SIZE), lambda i, ids: (0, 0, 0)),
                pl.BlockSpec((NUM_HEADS, E, HEAD_SIZE), lambda i, ids: (0, 0, 0)),
                pl.BlockSpec((NUM_HEADS, HEAD_SIZE, V), lambda i, ids: (0, 0, 0)),
                pl.BlockSpec((1, V), lambda i, ids: (0, 0)),
            ],
            out_specs=[
                pl.BlockSpec((B * T, E), lambda i, ids: (0, 0)),
                pl.BlockSpec((1, V), lambda i, ids: (0, 0)),
            ],
        ),
    )(ids, params["tok_emb"], params["pos_emb"], xh,
      params["Wq"], params["Wk"], params["Wv"], wll3, params["bll"])

    embedded = emb2d.reshape(B, T, E)       # metadata-only reshape outside the kernel
    return embedded, logits.reshape(1, 1, V)


if __name__ == "__main__":
    key = jax.random.PRNGKey(0)
    k_tok, k_pos, k_q, k_k, k_v, k_ll, k_bll, k_noise, k_ids = jax.random.split(key, 9)

    params = {
        "tok_emb": jax.random.normal(k_tok, (VOCAB_SIZE, N_EMBD), jnp.float32),
        "pos_emb": jax.random.normal(k_pos, (BLOCK_SIZE, N_EMBD), jnp.float32),
        # per-head projection weights, stored (in, out) -> kernel does x @ W
        "Wq": 0.1 * jax.random.normal(k_q, (NUM_HEADS, N_EMBD, HEAD_SIZE), jnp.float32),
        "Wk": 0.1 * jax.random.normal(k_k, (NUM_HEADS, N_EMBD, HEAD_SIZE), jnp.float32),
        "Wv": 0.1 * jax.random.normal(k_v, (NUM_HEADS, N_EMBD, HEAD_SIZE), jnp.float32),
        "Wll": 0.1 * jax.random.normal(k_ll, (N_EMBD, VOCAB_SIZE), jnp.float32),
        "bll": 0.01 * jax.random.normal(k_bll, (1, VOCAB_SIZE), jnp.float32),
    }
    # one deterministic (1,1,32) noise tensor per head (stand-in for torch.randn)
    head_noise = jax.random.normal(k_noise, (NUM_HEADS, N_EMBD), jnp.float32)

    # token ids: batch=2, seq=block_size=8
    ids = jax.random.randint(k_ids, (2, BLOCK_SIZE), 0, VOCAB_SIZE, dtype=jnp.int32)

    embedded, logits = language_model_forward(ids, params, head_noise)
    jax.block_until_ready(embedded)
    jax.block_until_ready(logits)

    assert embedded.shape == (2, BLOCK_SIZE, N_EMBD)
    assert logits.shape == (1, 1, VOCAB_SIZE)

    # ---- plain-JAX reference check -----------------------------------------
    ref_emb = params["tok_emb"][ids] + params["pos_emb"][None, :BLOCK_SIZE, :]
    xq = jnp.einsum('he,hef->hf', head_noise, params["Wq"])
    xk = jnp.einsum('he,hef->hf', head_noise, params["Wk"])
    xv = jnp.einsum('he,hef->hf', head_noise, params["Wv"])
    wei = jnp.sum(xq * xk, axis=-1, keepdims=True) * (HEAD_SIZE ** -0.5)
    p = jax.nn.softmax(wei, axis=-1)                     # == 1.0 (size-1 axis)
    cat = (p * xv).reshape(1, NUM_HEADS * HEAD_SIZE)
    ref_logits = (cat @ params["Wll"] + params["bll"]).reshape(1, 1, VOCAB_SIZE)

    assert jnp.allclose(embedded, ref_emb, atol=1e-4, rtol=1e-4)
    assert jnp.allclose(logits, ref_logits, atol=1e-3, rtol=1e-3)
    print("KERNEL_OK")
</pallas_src>

<mosaic_0001>
module attributes {stable_mosaic.version = 11 : i64} {
  func.func @lm_kernel(%arg0: i32, %arg1: memref<2x8xi32, #tpu.memory_space<smem>>, %arg2: memref<65x32xf32, #tpu.memory_space<vmem>>, %arg3: memref<8x32xf32, #tpu.memory_space<vmem>>, %arg4: memref<4x1x32xf32, #tpu.memory_space<vmem>>, %arg5: memref<4x32x8xf32, #tpu.memory_space<vmem>>, %arg6: memref<4x32x8xf32, #tpu.memory_space<vmem>>, %arg7: memref<4x32x8xf32, #tpu.memory_space<vmem>>, %arg8: memref<4x8x65xf32, #tpu.memory_space<vmem>>, %arg9: memref<1x65xf32, #tpu.memory_space<vmem>>, %arg10: memref<16x32xf32, #tpu.memory_space<vmem>>, %arg11: memref<1x65xf32, #tpu.memory_space<vmem>>) attributes {dimension_semantics = [#tpu.dimension_semantics<arbitrary>], iteration_bounds = array<i64: 1>, scalar_prefetch = 1 : i64, scratch_operands = 0 : i64, tpu.core_type = #tpu.core_type<tc>, window_params = [{pipeline_mode = #tpu.pipeline_mode<synchronous>, transform_indices = @transform_0, window_bounds = array<i64: 65, 32>}, {pipeline_mode = #tpu.pipeline_mode<synchronous>, transform_indices = @transform_1, window_bounds = array<i64: 8, 32>}, {pipeline_mode = #tpu.pipeline_mode<synchronous>, transform_indices = @transform_2, window_bounds = array<i64: 4, 1, 32>}, {pipeline_mode = #tpu.pipeline_mode<synchronous>, transform_indices = @transform_3, window_bounds = array<i64: 4, 32, 8>}, {pipeline_mode = #tpu.pipeline_mode<synchronous>, transform_indices = @transform_4, window_bounds = array<i64: 4, 32, 8>}, {pipeline_mode = #tpu.pipeline_mode<synchronous>, transform_indices = @transform_5, window_bounds = array<i64: 4, 32, 8>}, {pipeline_mode = #tpu.pipeline_mode<synchronous>, transform_indices = @transform_6, window_bounds = array<i64: 4, 8, 65>}, {pipeline_mode = #tpu.pipeline_mode<synchronous>, transform_indices = @transform_7, window_bounds = array<i64: 1, 65>}, {pipeline_mode = #tpu.pipeline_mode<synchronous>, transform_indices = @transform_8, window_bounds = array<i64: 16, 32>}, {pipeline_mode = #tpu.pipeline_mode<synchronous>, transform_indices = @transform_9, window_bounds = array<i64: 1, 65>}]} {
    %c0 = arith.constant 0 : index
    %c0_0 = arith.constant 0 : index
    %0 = memref.load %arg1[%c0, %c0_0] : memref<2x8xi32, #tpu.memory_space<smem>>
    %1 = arith.index_cast %0 : i32 to index
    %c0_1 = arith.constant 0 : index
    %2 = vector.load %arg2[%1, %c0_1] : memref<65x32xf32, #tpu.memory_space<vmem>>, vector<1x32xf32>
    %c0_2 = arith.constant 0 : index
    %c0_3 = arith.constant 0 : index
    %3 = vector.load %arg3[%c0_2, %c0_3] : memref<8x32xf32, #tpu.memory_space<vmem>>, vector<1x32xf32>
    %4 = arith.addf %2, %3 : vector<1x32xf32>
    %c0_4 = arith.constant 0 : index
    %c0_5 = arith.constant 0 : index
    %5 = vector.load %arg10[%c0_4, %c0_5] : memref<16x32xf32, #tpu.memory_space<vmem>>, vector<1x32xf32>
    tpu.vector_store %arg10[%c0_4, %c0_5], %4 {strides = array<i32>} : memref<16x32xf32, #tpu.memory_space<vmem>>, vector<1x32xf32>,
    %c0_6 = arith.constant 0 : index
    %c1 = arith.constant 1 : index
    %6 = memref.load %arg1[%c0_6, %c1] : memref<2x8xi32, #tpu.memory_space<smem>>
    %7 = arith.index_cast %6 : i32 to index
    %c0_7 = arith.constant 0 : index
    %8 = vector.load %arg2[%7, %c0_7] : memref<65x32xf32, #tpu.memory_space<vmem>>, vector<1x32xf32>
    %c1_8 = arith.constant 1 : index
    %c0_9 = arith.constant 0 : index
    %9 = vector.load %arg3[%c1_8, %c0_9] : memref<8x32xf32, #tpu.memory_space<vmem>>, vector<1x32xf32>
    %10 = arith.addf %8, %9 : vector<1x32xf32>
    %c1_10 = arith.constant 1 : index
    %c0_11 = arith.constant 0 : index
    %11 = vector.load %arg10[%c1_10, %c0_11] : memref<16x32xf32, #tpu.memory_space<vmem>>, vector<1x32xf32>
    tpu.vector_store %arg10[%c1_10, %c0_11], %10 {strides = array<i32>} : memref<16x32xf32, #tpu.memory_space<vmem>>, vector<1x32xf32>,
    %c0_12 = arith.constant 0 : index
    %c2 = arith.constant 2 : index
    %12 = memref.load %arg1[%c0_12, %c2] : memref<2x8xi32, #tpu.memory_space<smem>>
    %13 = arith.index_cast %12 : i32 to index
    %c0_13 = arith.constant 0 : index
    %14 = vector.load %arg2[%13, %c0_13] : memref<65x32xf32, #tpu.memory_space<vmem>>, vector<1x32xf32>
    %c2_14 = arith.constant 2 : index
    %c0_15 = arith.constant 0 : index
    %15 = vector.load %arg3[%c2_14, %c0_15] : memref<8x32xf32, #tpu.memory_space<vmem>>, vector<1x32xf32>
    %16 = arith.addf %14, %15 : vector<1x32xf32>
    %c2_16 = arith.constant 2 : index
    %c0_17 = arith.constant 0 : index
    %17 = vector.load %arg10[%c2_16, %c0_17] : memref<16x32xf32, #tpu.memory_space<vmem>>, vector<1x32xf32>
    tpu.vector_store %arg10[%c2_16, %c0_17], %16 {strides = array<i32>} : memref<16x32xf32, #tpu.memory_space<vmem>>, vector<1x32xf32>,
    %c0_18 = arith.constant 0 : index
    %c3 = arith.constant 3 : index
    %18 = memref.load %arg1[%c0_18, %c3] : memref<2x8xi32, #tpu.memory_space<smem>>
    %19 = arith.index_cast %18 : i32 to index
    %c0_19 = arith.constant 0 : index
    %20 = vector.load %arg2[%19, %c0_19] : memref<65x32xf32, #tpu.memory_space<vmem>>, vector<1x32xf32>
    %c3_20 = arith.constant 3 : index
    %c0_21 = arith.constant 0 : index
    %21 = vector.load %arg3[%c3_20, %c0_21] : memref<8x32xf32, #tpu.memory_space<vmem>>, vector<1x32xf32>
    %22 = arith.addf %20, %21 : vector<1x32xf32>
    %c3_22 = arith.constant 3 : index
    %c0_23 = arith.constant 0 : index
    %23 = vector.load %arg10[%c3_22, %c0_23] : memref<16x32xf32, #tpu.memory_space<vmem>>, vector<1x32xf32>
    tpu.vector_store %arg10[%c3_22, %c0_23], %22 {strides = array<i32>} : memref<16x32xf32, #tpu.memory_space<vmem>>, vector<1x32xf32>,
    %c0_24 = arith.constant 0 : index
    %c4 = arith.constant 4 : index
    %24 = memref.load %arg1[%c0_24, %c4] : memref<2x8xi32, #tpu.memory_space<smem>>
    %25 = arith.index_cast %24 : i32 to index
    %c0_25 = arith.constant 0 : index
    %26 = vector.load %arg2[%25, %c0_25] : memref<65x32xf32, #tpu.memory_space<vmem>>, vector<1x32xf32>
    %c4_26 = arith.constant 4 : index
    %c0_27 = arith.constant 0 : index
    %27 = vector.load %arg3[%c4_26, %c0_27] : memref<8x32xf32, #tpu.memory_space<vmem>>, vector<1x32xf32>
    %28 = arith.addf %26, %27 : vector<1x32xf32>
    %c4_28 = arith.constant 4 : index
    %c0_29 = arith.constant 0 : index
    %29 = vector.load %arg10[%c4_28, %c0_29] : memref<16x32xf32, #tpu.memory_space<vmem>>, vector<1x32xf32>
    tpu.vector_store %arg10[%c4_28, %c0_29], %28 {strides = array<i32>} : memref<16x32xf32, #tpu.memory_space<vmem>>, vector<1x32xf32>,
    %c0_30 = arith.constant 0 : index
    %c5 = arith.constant 5 : index
    %30 = memref.load %arg1[%c0_30, %c5] : memref<2x8xi32, #tpu.memory_space<smem>>
    %31 = arith.index_cast %30 : i32 to index
    %c0_31 = arith.constant 0 : index
    %32 = vector.load %arg2[%31, %c0_31] : memref<65x32xf32, #tpu.memory_space<vmem>>, vector<1x32xf32>
    %c5_32 = arith.constant 5 : index
    %c0_33 = arith.constant 0 : index
    %33 = vector.load %arg3[%c5_32, %c0_33] : memref<8x32xf32, #tpu.memory_space<vmem>>, vector<1x32xf32>
    %34 = arith.addf %32, %33 : vector<1x32xf32>
    %c5_34 = arith.constant 5 : index
    %c0_35 = arith.constant 0 : index
    %35 = vector.load %arg10[%c5_34, %c0_35] : memref<16x32xf32, #tpu.memory_space<vmem>>, vector<1x32xf32>
    tpu.vector_store %arg10[%c5_34, %c0_35], %34 {strides = array<i32>} : memref<16x32xf32, #tpu.memory_space<vmem>>, vector<1x32xf32>,
    %c0_36 = arith.constant 0 : index
    %c6 = arith.constant 6 : index
    %36 = memref.load %arg1[%c0_36, %c6] : memref<2x8xi32, #tpu.memory_space<smem>>
    %37 = arith.index_cast %36 : i32 to index
    %c0_37 = arith.constant 0 : index
    %38 = vector.load %arg2[%37, %c0_37] : memref<65x32xf32, #tpu.memory_space<vmem>>, vector<1x32xf32>
    %c6_38 = arith.constant 6 : index
    %c0_39 = arith.constant 0 : index
    %39 = vector.load %arg3[%c6_38, %c0_39] : memref<8x32xf32, #tpu.memory_space<vmem>>, vector<1x32xf32>
    %40 = arith.addf %38, %39 : vector<1x32xf32>
    %c6_40 = arith.constant 6 : index
    %c0_41 = arith.constant 0 : index
    %41 = vector.load %arg10[%c6_40, %c0_41] : memref<16x32xf32, #tpu.memory_space<vmem>>, vector<1x32xf32>
    tpu.vector_store %arg10[%c6_40, %c0_41], %40 {strides = array<i32>} : memref<16x32xf32, #tpu.memory_space<vmem>>, vector<1x32xf32>,
    %c0_42 = arith.constant 0 : index
    %c7 = arith.constant 7 : index
    %42 = memref.load %arg1[%c0_42, %c7] : memref<2x8xi32, #tpu.memory_space<smem>>
    %43 = arith.index_cast %42 : i32 to index
    %c0_43 = arith.constant 0 : index
    %44 = vector.load %arg2[%43, %c0_43] : memref<65x32xf32, #tpu.memory_space<vmem>>, vector<1x32xf32>
    %c7_44 = arith.constant 7 : index
    %c0_45 = arith.constant 0 : index
    %45 = vector.load %arg3[%c7_44, %c0_45] : memref<8x32xf32, #tpu.memory_space<vmem>>, vector<1x32xf32>
    %46 = arith.addf %44, %45 : vector<1x32xf32>
    %c7_46 = arith.constant 7 : index
    %c0_47 = arith.constant 0 : index
    %47 = vector.load %arg10[%c7_46, %c0_47] : memref<16x32xf32, #tpu.memory_space<vmem>>, vector<1x32xf32>
    tpu.vector_store %arg10[%c7_46, %c0_47], %46 {strides = array<i32>} : memref<16x32xf32, #tpu.memory_space<vmem>>, vector<1x32xf32>,
    %c1_48 = arith.constant 1 : index
    %c0_49 = arith.constant 0 : index
    %48 = memref.load %arg1[%c1_48, %c0_49] : memref<2x8xi32, #tpu.memory_space<smem>>
    %49 = arith.index_cast %48 : i32 to index
    %c0_50 = arith.constant 0 : index
    %50 = vector.load %arg2[%49, %c0_50] : memref<65x32xf32, #tpu.memory_space<vmem>>, vector<1x32xf32>
    %c0_51 = arith.constant 0 : index
    %c0_52 = arith.constant 0 : index
    %51 = vector.load %arg3[%c0_51, %c0_52] : memref<8x32xf32, #tpu.memory_space<vmem>>, vector<1x32xf32>
    %52 = arith.addf %50, %51 : vector<1x32xf32>
    %c8 = arith.constant 8 : index
    %c0_53 = arith.constant 0 : index
    %53 = vector.load %arg10[%c8, %c0_53] : memref<16x32xf32, #tpu.memory_space<vmem>>, vector<1x32xf32>
    tpu.vector_store %arg10[%c8, %c0_53], %52 {strides = array<i32>} : memref<16x32xf32, #tpu.memory_space<vmem>>, vector<1x32xf32>,
    %c1_54 = arith.constant 1 : index
    %c1_55 = arith.constant 1 : index
    %54 = memref.load %arg1[%c1_54, %c1_55] : memref<2x8xi32, #tpu.memory_space<smem>>
    %55 = arith.index_cast %54 : i32 to index
    %c0_56 = arith.constant 0 : index
    %56 = vector.load %arg2[%55, %c0_56] : memref<65x32xf32, #tpu.memory_space<vmem>>, vector<1x32xf32>
    %c1_57 = arith.constant 1 : index
    %c0_58 = arith.constant 0 : index
    %57 = vector.load %arg3[%c1_57, %c0_58] : memref<8x32xf32, #tpu.memory_space<vmem>>, vector<1x32xf32>
    %58 = arith.addf %56, %57 : vector<1x32xf32>
    %c9 = arith.constant 9 : index
    %c0_59 = arith.constant 0 : index
    %59 = vector.load %arg10[%c9, %c0_59] : memref<16x32xf32, #tpu.memory_space<vmem>>, vector<1x32xf32>
    tpu.vector_store %arg10[%c9, %c0_59], %58 {strides = array<i32>} : memref<16x32xf32, #tpu.memory_space<vmem>>, vector<1x32xf32>,
    %c1_60 = arith.constant 1 : index
    %c2_61 = arith.constant 2 : index
    %60 = memref.load %arg1[%c1_60, %c2_61] : memref<2x8xi32, #tpu.memory_space<smem>>
    %61 = arith.index_cast %60 : i32 to index
    %c0_62 = arith.constant 0 : index
    %62 = vector.load %arg2[%61, %c0_62] : memref<65x32xf32, #tpu.memory_space<vmem>>, vector<1x32xf32>
    %c2_63 = arith.constant 2 : index
    %c0_64 = arith.constant 0 : index
    %63 = vector.load %arg3[%c2_63, %c0_64] : memref<8x32xf32, #tpu.memory_space<vmem>>, vector<1x32xf32>
    %64 = arith.addf %62, %63 : vector<1x32xf32>
    %c10 = arith.constant 10 : index
    %c0_65 = arith.constant 0 : index
    %65 = vector.load %arg10[%c10, %c0_65] : memref<16x32xf32, #tpu.memory_space<vmem>>, vector<1x32xf32>
    tpu.vector_store %arg10[%c10, %c0_65], %64 {strides = array<i32>} : memref<16x32xf32, #tpu.memory_space<vmem>>, vector<1x32xf32>,
    %c1_66 = arith.constant 1 : index
    %c3_67 = arith.constant 3 : index
    %66 = memref.load %arg1[%c1_66, %c3_67] : memref<2x8xi32, #tpu.memory_space<smem>>
    %67 = arith.index_cast %66 : i32 to index
    %c0_68 = arith.constant 0 : index
    %68 = vector.load %arg2[%67, %c0_68] : memref<65x32xf32, #tpu.memory_space<vmem>>, vector<1x32xf32>
    %c3_69 = arith.constant 3 : index
    %c0_70 = arith.constant 0 : index
    %69 = vector.load %arg3[%c3_69, %c0_70] : memref<8x32xf32, #tpu.memory_space<vmem>>, vector<1x32xf32>
    %70 = arith.addf %68, %69 : vector<1x32xf32>
    %c11 = arith.constant 11 : index
    %c0_71 = arith.constant 0 : index
    %71 = vector.load %arg10[%c11, %c0_71] : memref<16x32xf32, #tpu.memory_space<vmem>>, vector<1x32xf32>
    tpu.vector_store %arg10[%c11, %c0_71], %70 {strides = array<i32>} : memref<16x32xf32, #tpu.memory_space<vmem>>, vector<1x32xf32>,
    %c1_72 = arith.constant 1 : index
    %c4_73 = arith.constant 4 : index
    %72 = memref.load %arg1[%c1_72, %c4_73] : memref<2x8xi32, #tpu.memory_space<smem>>
    %73 = arith.index_cast %72 : i32 to index
    %c0_74 = arith.constant 0 : index
    %74 = vector.load %arg2[%73, %c0_74] : memref<65x32xf32, #tpu.memory_space<vmem>>, vector<1x32xf32>
    %c4_75 = arith.constant 4 : index
    %c0_76 = arith.constant 0 : index
    %75 = vector.load %arg3[%c4_75, %c0_76] : memref<8x32xf32, #tpu.memory_space<vmem>>, vector<1x32xf32>
    %76 = arith.addf %74, %75 : vector<1x32xf32>
    %c12 = arith.constant 12 : index
    %c0_77 = arith.constant 0 : index
    %77 = vector.load %arg10[%c12, %c0_77] : memref<16x32xf32, #tpu.memory_space<vmem>>, vector<1x32xf32>
    tpu.vector_store %arg10[%c12, %c0_77], %76 {strides = array<i32>} : memref<16x32xf32, #tpu.memory_space<vmem>>, vector<1x32xf32>,
    %c1_78 = arith.constant 1 : index
    %c5_79 = arith.constant 5 : index
    %78 = memref.load %arg1[%c1_78, %c5_79] : memref<2x8xi32, #tpu.memory_space<smem>>
    %79 = arith.index_cast %78 : i32 to index
    %c0_80 = arith.constant 0 : index
    %80 = vector.load %arg2[%79, %c0_80] : memref<65x32xf32, #tpu.memory_space<vmem>>, vector<1x32xf32>
    %c5_81 = arith.constant 5 : index
    %c0_82 = arith.constant 0 : index
    %81 = vector.load %arg3[%c5_81, %c0_82] : memref<8x32xf32, #tpu.memory_space<vmem>>, vector<1x32xf32>
    %82 = arith.addf %80, %81 : vector<1x32xf32>
    %c13 = arith.constant 13 : index
    %c0_83 = arith.constant 0 : index
    %83 = vector.load %arg10[%c13, %c0_83] : memref<16x32xf32, #tpu.memory_space<vmem>>, vector<1x32xf32>
    tpu.vector_store %arg10[%c13, %c0_83], %82 {strides = array<i32>} : memref<16x32xf32, #tpu.memory_space<vmem>>, vector<1x32xf32>,
    %c1_84 = arith.constant 1 : index
    %c6_85 = arith.constant 6 : index
    %84 = memref.load %arg1[%c1_84, %c6_85] : memref<2x8xi32, #tpu.memory_space<smem>>
    %85 = arith.index_cast %84 : i32 to index
    %c0_86 = arith.constant 0 : index
    %86 = vector.load %arg2[%85, %c0_86] : memref<65x32xf32, #tpu.memory_space<vmem>>, vector<1x32xf32>
    %c6_87 = arith.constant 6 : index
    %c0_88 = arith.constant 0 : index
    %87 = vector.load %arg3[%c6_87, %c0_88] : memref<8x32xf32, #tpu.memory_space<vmem>>, vector<1x32xf32>
    %88 = arith.addf %86, %87 : vector<1x32xf32>
    %c14 = arith.constant 14 : index
    %c0_89 = arith.constant 0 : index
    %89 = vector.load %arg10[%c14, %c0_89] : memref<16x32xf32, #tpu.memory_space<vmem>>, vector<1x32xf32>
    tpu.vector_store %arg10[%c14, %c0_89], %88 {strides = array<i32>} : memref<16x32xf32, #tpu.memory_space<vmem>>, vector<1x32xf32>,
    %c1_90 = arith.constant 1 : index
    %c7_91 = arith.constant 7 : index
    %90 = memref.load %arg1[%c1_90, %c7_91] : memref<2x8xi32, #tpu.memory_space<smem>>
    %91 = arith.index_cast %90 : i32 to index
    %c0_92 = arith.constant 0 : index
    %92 = vector.load %arg2[%91, %c0_92] : memref<65x32xf32, #tpu.memory_space<vmem>>, vector<1x32xf32>
    %c7_93 = arith.constant 7 : index
    %c0_94 = arith.constant 0 : index
    %93 = vector.load %arg3[%c7_93, %c0_94] : memref<8x32xf32, #tpu.memory_space<vmem>>, vector<1x32xf32>
    %94 = arith.addf %92, %93 : vector<1x32xf32>
    %c15 = arith.constant 15 : index
    %c0_95 = arith.constant 0 : index
    %95 = vector.load %arg10[%c15, %c0_95] : memref<16x32xf32, #tpu.memory_space<vmem>>, vector<1x32xf32>
    tpu.vector_store %arg10[%c15, %c0_95], %94 {strides = array<i32>} : memref<16x32xf32, #tpu.memory_space<vmem>>, vector<1x32xf32>,
    %c0_96 = arith.constant 0 : index
    %c0_97 = arith.constant 0 : index
    %c0_98 = arith.constant 0 : index
    %96 = vector.load %arg4[%c0_96, %c0_97, %c0_98] : memref<4x1x32xf32, #tpu.memory_space<vmem>>, vector<4x1x32xf32>
    %c0_99 = arith.constant 0 : index
    %c0_100 = arith.constant 0 : index
    %c0_101 = arith.constant 0 : index
    %97 = vector.load %arg5[%c0_99, %c0_100, %c0_101] : memref<4x32x8xf32, #tpu.memory_space<vmem>>, vector<4x32x8xf32>
    "tpu.trace_start"() <{level = 10 : i32, message = "hte,hef->htf"}> : () -> ()
    %cst = arith.constant dense<0.000000e+00> : vector<4x1x8xf32>
    %98 = tpu.matmul %96, %97, %cst {dimension_numbers = #tpu.dot_dimension_numbers<[2], [1], [1], [2], [0, 0, 0, 1, 1, 2], [0], [0]>} : vector<4x1x32xf32>, vector<4x32x8xf32>, vector<4x1x8xf32> -> vector<4x1x8xf32>
    "tpu.trace_stop"() : () -> ()
    %c0_102 = arith.constant 0 : index
    %c0_103 = arith.constant 0 : index
    %c0_104 = arith.constant 0 : index
    %99 = vector.load %arg6[%c0_102, %c0_103, %c0_104] : memref<4x32x8xf32, #tpu.memory_space<vmem>>, vector<4x32x8xf32>
    "tpu.trace_start"() <{level = 10 : i32, message = "hte,hef->htf"}> : () -> ()
    %cst_105 = arith.constant dense<0.000000e+00> : vector<4x1x8xf32>
    %100 = tpu.matmul %96, %99, %cst_105 {dimension_numbers = #tpu.dot_dimension_numbers<[2], [1], [1], [2], [0, 0, 0, 1, 1, 2], [0], [0]>} : vector<4x1x32xf32>, vector<4x32x8xf32>, vector<4x1x8xf32> -> vector<4x1x8xf32>
    "tpu.trace_stop"() : () -> ()
    %c0_106 = arith.constant 0 : index
    %c0_107 = arith.constant 0 : index
    %c0_108 = arith.constant 0 : index
    %101 = vector.load %arg7[%c0_106, %c0_107, %c0_108] : memref<4x32x8xf32, #tpu.memory_space<vmem>>, vector<4x32x8xf32>
    "tpu.trace_start"() <{level = 10 : i32, message = "hte,hef->htf"}> : () -> ()
    %cst_109 = arith.constant dense<0.000000e+00> : vector<4x1x8xf32>
    %102 = tpu.matmul %96, %101, %cst_109 {dimension_numbers = #tpu.dot_dimension_numbers<[2], [1], [1], [2], [0, 0, 0, 1, 1, 2], [0], [0]>} : vector<4x1x32xf32>, vector<4x32x8xf32>, vector<4x1x8xf32> -> vector<4x1x8xf32>
    "tpu.trace_stop"() : () -> ()
    %103 = arith.mulf %98, %100 : vector<4x1x8xf32>
    %cst_110 = arith.constant dense<0.000000e+00> : vector<4x1xf32>
    %104 = vector.multi_reduction <add>, %103, %cst_110 [2] : vector<4x1x8xf32> to vector<4x1xf32>
    %105 = vector.shape_cast %104 : vector<4x1xf32> to vector<4x1x1xf32>
    %cst_111 = arith.constant 0.353553385 : f32
    %106 = vector.broadcast %cst_111 : f32 to vector<4x1x1xf32>
    %107 = arith.mulf %105, %106 : vector<4x1x1xf32>
    %cst_112 = arith.constant dense<0xFF800000> : vector<4x1xf32>
    %108 = vector.multi_reduction <maximumf>, %107, %cst_112 [2] : vector<4x1x1xf32> to vector<4x1xf32>
    %109 = vector.shape_cast %108 : vector<4x1xf32> to vector<4x1x1xf32>
    %110 = arith.subf %107, %109 : vector<4x1x1xf32>
    %111 = math.exp %110 : vector<4x1x1xf32>
    %cst_113 = arith.constant dense<0.000000e+00> : vector<4x1xf32>
    %112 = vector.multi_reduction <add>, %111, %cst_113 [2] : vector<4x1x1xf32> to vector<4x1xf32>
    %113 = vector.shape_cast %112 : vector<4x1xf32> to vector<4x1x1xf32>
    %114 = arith.divf %111, %113 : vector<4x1x1xf32>
    %115 = vector.broadcast %114 : vector<4x1x1xf32> to vector<4x1x8xf32>
    %116 = arith.mulf %115, %102 : vector<4x1x8xf32>
    %c0_114 = arith.constant 0 : index
    %c0_115 = arith.constant 0 : index
    %c0_116 = arith.constant 0 : index
    %117 = vector.load %arg8[%c0_114, %c0_115, %c0_116] : memref<4x8x65xf32, #tpu.memory_space<vmem>>, vector<4x8x65xf32>
    "tpu.trace_start"() <{level = 10 : i32, message = "htf,hfv->htv"}> : () -> ()
    %cst_117 = arith.constant dense<0.000000e+00> : vector<4x1x65xf32>
    %118 = tpu.matmul %116, %117, %cst_117 {dimension_numbers = #tpu.dot_dimension_numbers<[2], [1], [1], [2], [0, 0, 0, 1, 1, 2], [0], [0]>} : vector<4x1x8xf32>, vector<4x8x65xf32>, vector<4x1x65xf32> -> vector<4x1x65xf32>
    "tpu.trace_stop"() : () -> ()
    %cst_118 = arith.constant dense<0.000000e+00> : vector<1x65xf32>
    %119 = vector.multi_reduction <add>, %118, %cst_118 [0] : vector<4x1x65xf32> to vector<1x65xf32>
    %c0_119 = arith.constant 0 : index
    %c0_120 = arith.constant 0 : index
    %120 = vector.load %arg9[%c0_119, %c0_120] : memref<1x65xf32, #tpu.memory_space<vmem>>, vector<1x65xf32>
    %121 = arith.addf %119, %120 : vector<1x65xf32>
    %c0_121 = arith.constant 0 : index
    %c0_122 = arith.constant 0 : index
    %122 = vector.load %arg11[%c0_121, %c0_122] : memref<1x65xf32, #tpu.memory_space<vmem>>, vector<1x65xf32>
    tpu.vector_store %arg11[%c0_121, %c0_122], %121 {strides = array<i32>} : memref<1x65xf32, #tpu.memory_space<vmem>>, vector<1x65xf32>,
    return
  }
  func.func @transform_0(%arg0: i32, %arg1: memref<2x8xi32, #tpu.memory_space<smem>>) -> (i32, i32) {
    %c0_i32 = arith.constant 0 : i32
    %c0_i32_0 = arith.constant 0 : i32
    %c0_i32_1 = arith.constant 0 : i32
    return %c0_i32, %c0_i32_0 : i32, i32
  }
  func.func @transform_1(%arg0: i32, %arg1: memref<2x8xi32, #tpu.memory_space<smem>>) -> (i32, i32) {
    %c0_i32 = arith.constant 0 : i32
    %c0_i32_0 = arith.constant 0 : i32
    %c0_i32_1 = arith.constant 0 : i32
    return %c0_i32, %c0_i32_0 : i32, i32
  }
  func.func @transform_2(%arg0: i32, %arg1: memref<2x8xi32, #tpu.memory_space<smem>>) -> (i32, i32, i32) {
    %c0_i32 = arith.constant 0 : i32
    %c0_i32_0 = arith.constant 0 : i32
    %c0_i32_1 = arith.constant 0 : i32
    %c0_i32_2 = arith.constant 0 : i32
    return %c0_i32, %c0_i32_0, %c0_i32_1 : i32, i32, i32
  }
  func.func @transform_3(%arg0: i32, %arg1: memref<2x8xi32, #tpu.memory_space<smem>>) -> (i32, i32, i32) {
    %c0_i32 = arith.constant 0 : i32
    %c0_i32_0 = arith.constant 0 : i32
    %c0_i32_1 = arith.constant 0 : i32
    %c0_i32_2 = arith.constant 0 : i32
    return %c0_i32, %c0_i32_0, %c0_i32_1 : i32, i32, i32
  }
  func.func @transform_4(%arg0: i32, %arg1: memref<2x8xi32, #tpu.memory_space<smem>>) -> (i32, i32, i32) {
    %c0_i32 = arith.constant 0 : i32
    %c0_i32_0 = arith.constant 0 : i32
    %c0_i32_1 = arith.constant 0 : i32
    %c0_i32_2 = arith.constant 0 : i32
    return %c0_i32, %c0_i32_0, %c0_i32_1 : i32, i32, i32
  }
  func.func @transform_5(%arg0: i32, %arg1: memref<2x8xi32, #tpu.memory_space<smem>>) -> (i32, i32, i32) {
    %c0_i32 = arith.constant 0 : i32
    %c0_i32_0 = arith.constant 0 : i32
    %c0_i32_1 = arith.constant 0 : i32
    %c0_i32_2 = arith.constant 0 : i32
    return %c0_i32, %c0_i32_0, %c0_i32_1 : i32, i32, i32
  }
  func.func @transform_6(%arg0: i32, %arg1: memref<2x8xi32, #tpu.memory_space<smem>>) -> (i32, i32, i32) {
    %c0_i32 = arith.constant 0 : i32
    %c0_i32_0 = arith.constant 0 : i32
    %c0_i32_1 = arith.constant 0 : i32
    %c0_i32_2 = arith.constant 0 : i32
    return %c0_i32, %c0_i32_0, %c0_i32_1 : i32, i32, i32
  }
  func.func @transform_7(%arg0: i32, %arg1: memref<2x8xi32, #tpu.memory_space<smem>>) -> (i32, i32) {
    %c0_i32 = arith.constant 0 : i32
    %c0_i32_0 = arith.constant 0 : i32
    %c0_i32_1 = arith.constant 0 : i32
    return %c0_i32, %c0_i32_0 : i32, i32
  }
  func.func @transform_8(%arg0: i32, %arg1: memref<2x8xi32, #tpu.memory_space<smem>>) -> (i32, i32) {
    %c0_i32 = arith.constant 0 : i32
    %c0_i32_0 = arith.constant 0 : i32
    %c0_i32_1 = arith.constant 0 : i32
    return %c0_i32, %c0_i32_0 : i32, i32
  }
  func.func @transform_9(%arg0: i32, %arg1: memref<2x8xi32, #tpu.memory_space<smem>>) -> (i32, i32) {
    %c0_i32 = arith.constant 0 : i32
    %c0_i32_0 = arith.constant 0 : i32
    %c0_i32_1 = arith.constant 0 : i32
    return %c0_i32, %c0_i32_0 : i32, i32
  }
}

</mosaic_0001>

<llo_original>
// kernel: tpu_custom_call.1
$region0: #{tpu_custom_call.1}
  #allocation0 [shape = 'u32[]', space=smem, size = 0x4, offset = 0x4, fixed_abs, tag = 'smem constant byte address 0x4 - core index']
  #allocation1 [shape = 'u32[72,128]{1,0:T(1,128)}', space=vmem, size = 0x9000, scoped, tag = 'internal scratch']
  #allocation2 [shape = 's32[1]{0}', space=sflag, size = 0x4, scoped, tag = 'scoped memory for tpu_custom_call.1']
  #allocation3 [shape = 'u8[1024]{0}', space=smem, size = 0x400, scoped, tag = 'prefetched SMEM operand 0']
  %s0 = inlined_call_operand.vmem [shape: s32[2,8], index: 0, kind: input, shape index: {}]
  %s1 = inlined_call_operand.vmem [shape: f32[65,32], index: 1, kind: input, shape index: {}]
  %s2 = inlined_call_operand.vmem [shape: f32[8,32], index: 2, kind: input, shape index: {}]
  %s3 = inlined_call_operand.vmem [shape: f32[4,1,32], index: 3, kind: input, shape index: {}]
  %s4 = inlined_call_operand.vmem [shape: f32[4,32,8], index: 4, kind: input, shape index: {}]
  %s5 = inlined_call_operand.vmem [shape: f32[4,32,8], index: 5, kind: input, shape index: {}]
  %s6 = inlined_call_operand.vmem [shape: f32[4,32,8], index: 6, kind: input, shape index: {}]
  %s7 = inlined_call_operand.vmem [shape: f32[4,8,65], index: 7, kind: input, shape index: {}]
  %s8 = inlined_call_operand.vmem [shape: f32[1,65], index: 8, kind: input, shape index: {}]
  %s9 = inlined_call_operand.hbm [shape: f32[16,32], index: 9, kind: output, shape index: {0}]
  %s10 = inlined_call_operand.hbm [shape: f32[1,65], index: 10, kind: output, shape index: {1}]
  %11 = xla_tuple %s9, %s10
  %s12 = sld [smem:[#allocation0]]
  $region50: #{tpu_custom_call.1} parent=0
    _
  %s14 = ssub.s32 1, %s12
  %s15 = scalar_select 0, %s14, %s12
  %s17 = sshll.u32 %s0, 4
  %s18 = int_to_ptr.vmem [resolvable:$true] %s17
  %20 = dma.vmem_to_smem %s18, 32, [#allocation3], [#allocation2]
  %22 = dma.done [#allocation2], 32
  %23 = sfence
  $region1: #{tpu_custom_call.1} parent=0
    #allocation4 [shape = 'u8[8192]{0}', space=vmem, size = 0x2000, scoped, tag = 'output window, operand 0, single buffered']
    #allocation5 [shape = 's32[1]{0}', space=sflag, size = 0x4, scoped, tag = 'scoped memory for tpu_custom_call.1']
    #allocation6 [shape = 'u8[512]{0}', space=vmem, size = 0x400, scoped, tag = 'output window, operand 1, single buffered']
    #allocation7 [shape = 's32[1]{0}', space=sflag, size = 0x4, scoped, tag = 'scoped memory for tpu_custom_call.1']
    %24 = vsyncpa [#allocation5], 0
    %25 = vsyncpa [#allocation7], 0
    // Predicated region
    $region2: #{tpu_custom_call.1} parent=1 // pred_check
      _
    $region3: #{tpu_custom_call.1} parent=1 // pred_check_branch
      %27 = sbr.rel (0) target = $region5
    $region4: #{tpu_custom_call.1} parent=1 // pred_region
      _
    $region5: #{tpu_custom_call.1} parent=1 // pred_fallthru
      _
    // Predicated region
    $region6: #{tpu_custom_call.1} parent=1 // pred_check
      _
    $region7: #{tpu_custom_call.1} parent=1 // pred_check_branch
      %29 = sbr.rel (0) target = $region9
    $region8: #{tpu_custom_call.1} parent=1 // pred_region
      _
    $region9: #{tpu_custom_call.1} parent=1 // pred_fallthru
      _
    // Predicated region
    $region10: #{tpu_custom_call.1} parent=1 // pred_check
      _
    $region11: #{tpu_custom_call.1} parent=1 // pred_check_branch
      %31 = sbr.rel (0) target = $region13
    $region12: #{tpu_custom_call.1} parent=1 // pred_region
      _
    $region13: #{tpu_custom_call.1} parent=1 // pred_fallthru
      _
    // Predicated region
    $region14: #{tpu_custom_call.1} parent=1 // pred_check
      _
    $region15: #{tpu_custom_call.1} parent=1 // pred_check_branch
      %33 = sbr.rel (0) target = $region17
    $region16: #{tpu_custom_call.1} parent=1 // pred_region
      _
    $region17: #{tpu_custom_call.1} parent=1 // pred_fallthru
      _
    // Predicated region
    $region18: #{tpu_custom_call.1} parent=1 // pred_check
      _
    $region19: #{tpu_custom_call.1} parent=1 // pred_check_branch
      %35 = sbr.rel (0) target = $region21
    $region20: #{tpu_custom_call.1} parent=1 // pred_region
      _
    $region21: #{tpu_custom_call.1} parent=1 // pred_fallthru
      _
    // Predicated region
    $region22: #{tpu_custom_call.1} parent=1 // pred_check
      _
    $region23: #{tpu_custom_call.1} parent=1 // pred_check_branch
      %37 = sbr.rel (0) target = $region25
    $region24: #{tpu_custom_call.1} parent=1 // pred_region
      _
    $region25: #{tpu_custom_call.1} parent=1 // pred_fallthru
      _
    // Predicated region
    $region26: #{tpu_custom_call.1} parent=1 // pred_check
      _
    $region27: #{tpu_custom_call.1} parent=1 // pred_check_branch
      %39 = sbr.rel (0) target = $region29
    $region28: #{tpu_custom_call.1} parent=1 // pred_region
      _
    $region29: #{tpu_custom_call.1} parent=1 // pred_fallthru
      _
    // Predicated region
    $region30: #{tpu_custom_call.1} parent=1 // pred_check
      _
    $region31: #{tpu_custom_call.1} parent=1 // pred_check_branch
      %41 = sbr.rel (0) target = $region33
    $region32: #{tpu_custom_call.1} parent=1 // pred_region
      _
    $region33: #{tpu_custom_call.1} parent=1 // pred_fallthru
      _
    %s42 = sld [smem:[#allocation3]]
    %s43 = scalar_lea.vmem %s1, %s42
    %v44 = vld [vmem:[%s43] sm:$0x1]
    %v45 = vld [vmem:[%s2] sm:$0x1]
    %v46 = vadd.f32 %v44, %v45
    %vm47 = vcmask 253952
    %48 = vst.msk [vmem:[#allocation4] sm:$0x1] %vm47, %v46
    %s49 = sld [smem:[#allocation3 + $0x1]]
    %s50 = scalar_lea.vmem %s1, %s49
    %v51 = vld [vmem:[%s50] sm:$0x1]
    %v52 = vld [vmem:[%s2 + $0x1] sm:$0x1]
    %v53 = vadd.f32 %v51, %v52
    %54 = vst.msk [vmem:[#allocation4 + $0x1] sm:$0x1] %vm47, %v53
    %s55 = sld [smem:[#allocation3 + $0x2]]
    %s56 = scalar_lea.vmem %s1, %s55
    %v57 = vld [vmem:[%s56] sm:$0x1]
    %v58 = vld [vmem:[%s2 + $0x2] sm:$0x1]
    %v59 = vadd.f32 %v57, %v58
    %60 = vst.msk [vmem:[#allocation4 + $0x2] sm:$0x1] %vm47, %v59
    %s61 = sld [smem:[#allocation3 + $0x3]]
    %s62 = scalar_lea.vmem %s1, %s61
    %v63 = vld [vmem:[%s62] sm:$0x1]
    %v64 = vld [vmem:[%s2 + $0x3] sm:$0x1]
    %v65 = vadd.f32 %v63, %v64
    %66 = vst.msk [vmem:[#allocation4 + $0x3] sm:$0x1] %vm47, %v65
    %s67 = sld [smem:[#allocation3 + $0x4]]
    %s68 = scalar_lea.vmem %s1, %s67
    %v69 = vld [vmem:[%s68] sm:$0x1]
    %v70 = vld [vmem:[%s2 + $0x4] sm:$0x1]
    %v71 = vadd.f32 %v69, %v70
    %72 = vst.msk [vmem:[#allocation4 + $0x4] sm:$0x1] %vm47, %v71
    %s73 = sld [smem:[#allocation3 + $0x5]]
    %s74 = scalar_lea.vmem %s1, %s73
    %v75 = vld [vmem:[%s74] sm:$0x1]
    %v76 = vld [vmem:[%s2 + $0x5] sm:$0x1]
    %v77 = vadd.f32 %v75, %v76
    %78 = vst.msk [vmem:[#allocation4 + $0x5] sm:$0x1] %vm47, %v77
    %s79 = sld [smem:[#allocation3 + $0x6]]
    %s80 = scalar_lea.vmem %s1, %s79
    %v81 = vld [vmem:[%s80] sm:$0x1]
    %v82 = vld [vmem:[%s2 + $0x6] sm:$0x1]
    %v83 = vadd.f32 %v81, %v82
    %84 = vst.msk [vmem:[#allocation4 + $0x6] sm:$0x1] %vm47, %v83
    %s85 = sld [smem:[#allocation3 + $0x7]]
    %s86 = scalar_lea.vmem %s1, %s85
    %v87 = vld [vmem:[%s86] sm:$0x1]
    %v88 = vld [vmem:[%s2 + $0x7] sm:$0x1]
    %v89 = vadd.f32 %v87, %v88
    %90 = vst.msk [vmem:[#allocation4 + $0x7] sm:$0x1] %vm47, %v89
    %s91 = sld [smem:[#allocation3 + $0x80]]
    %s92 = scalar_lea.vmem %s1, %s91
    %v93 = vld [vmem:[%s92] sm:$0x1]
    %v94 = vld [vmem:[%s2] sm:$0x1]
    %v95 = vadd.f32 %v93, %v94
    %96 = vst.msk [vmem:[#allocation4 + $0x8] sm:$0x1] %vm47, %v95
    %s97 = sld [smem:[#allocation3 + $0x81]]
    %s98 = scalar_lea.vmem %s1, %s97
    %v99 = vld [vmem:[%s98] sm:$0x1]
    %v100 = vld [vmem:[%s2 + $0x1] sm:$0x1]
    %v101 = vadd.f32 %v99, %v100
    %102 = vst.msk [vmem:[#allocation4 + $0x9] sm:$0x1] %vm47, %v101
    %s103 = sld [smem:[#allocation3 + $0x82]]
    %s104 = scalar_lea.vmem %s1, %s103
    %v105 = vld [vmem:[%s104] sm:$0x1]
    %v106 = vld [vmem:[%s2 + $0x2] sm:$0x1]
    %v107 = vadd.f32 %v105, %v106
    %108 = vst.msk [vmem:[#allocation4 + $0xa] sm:$0x1] %vm47, %v107
    %s109 = sld [smem:[#allocation3 + $0x83]]
    %s110 = scalar_lea.vmem %s1, %s109
    %v111 = vld [vmem:[%s110] sm:$0x1]
    %v112 = vld [vmem:[%s2 + $0x3] sm:$0x1]
    %v113 = vadd.f32 %v111, %v112
    %114 = vst.msk [vmem:[#allocation4 + $0xb] sm:$0x1] %vm47, %v113
    %s115 = sld [smem:[#allocation3 + $0x84]]
    %s116 = scalar_lea.vmem %s1, %s115
    %v117 = vld [vmem:[%s116] sm:$0x1]
    %v118 = vld [vmem:[%s2 + $0x4] sm:$0x1]
    %v119 = vadd.f32 %v117, %v118
    %120 = vst.msk [vmem:[#allocation4 + $0xc] sm:$0x1] %vm47, %v119
    %s121 = sld [smem:[#allocation3 + $0x85]]
    %s122 = scalar_lea.vmem %s1, %s121
    %v123 = vld [vmem:[%s122] sm:$0x1]
    %v124 = vld [vmem:[%s2 + $0x5] sm:$0x1]
    %v125 = vadd.f32 %v123, %v124
    %126 = vst.msk [vmem:[#allocation4 + $0xd] sm:$0x1] %vm47, %v125
    %s127 = sld [smem:[#allocation3 + $0x86]]
    %s128 = scalar_lea.vmem %s1, %s127
    %v129 = vld [vmem:[%s128] sm:$0x1]
    %v130 = vld [vmem:[%s2 + $0x6] sm:$0x1]
    %v131 = vadd.f32 %v129, %v130
    %132 = vst.msk [vmem:[#allocation4 + $0xe] sm:$0x1] %vm47, %v131
    %s133 = sld [smem:[#allocation3 + $0x87]]
    %s134 = scalar_lea.vmem %s1, %s133
    %v135 = vld [vmem:[%s134] sm:$0x1]
    %v136 = vld [vmem:[%s2 + $0x7] sm:$0x1]
    %v137 = vadd.f32 %v135, %v136
    %138 = vst.msk [vmem:[#allocation4 + $0xf] sm:$0x1] %vm47, %v137
    %v139 = vld [vmem:[%s3] sm:$0x1]
    %v140 = vld [vmem:[%s3 + $0x1] sm:$0x1]
    %v141 = vld [vmem:[%s3 + $0x2] sm:$0x1]
    %v142 = vld [vmem:[%s3 + $0x3] sm:$0x1]
    %v143 = vld [vmem:[%s4] sm:$0xff]
    %v144 = vld [vmem:[%s4 + $0x8] sm:$0xff]
    %v145 = vld [vmem:[%s4 + $0x10] sm:$0xff]
    %v146 = vld [vmem:[%s4 + $0x18] sm:$0xff]
    %v147 = vld [vmem:[%s4 + $0x20] sm:$0xff]
    %v148 = vld [vmem:[%s4 + $0x28] sm:$0xff]
    %v149 = vld [vmem:[%s4 + $0x30] sm:$0xff]
    %v150 = vld [vmem:[%s4 + $0x38] sm:$0xff]
    %v151 = vld [vmem:[%s4 + $0x40] sm:$0xff]
    %v152 = vld [vmem:[%s4 + $0x48] sm:$0xff]
    %v153 = vld [vmem:[%s4 + $0x50] sm:$0xff]
    %v154 = vld [vmem:[%s4 + $0x58] sm:$0xff]
    %v155 = vld [vmem:[%s4 + $0x60] sm:$0xff]
    %v156 = vld [vmem:[%s4 + $0x68] sm:$0xff]
    %v157 = vld [vmem:[%s4 + $0x70] sm:$0xff]
    %v158 = vld [vmem:[%s4 + $0x78] sm:$0xff]
    %vm159 = vcmask 261120
    %v161 = vsel %vm159, %v139, 0
    %163 = vmatpush.msra.mxu0 0.0
    %164 = vmatpush.msra.mxu0 0.0
    %165 = vmatpush.msra.mxu0 0.0
    %166 = vmatpush.msra.mxu0 0.0
    %167 = vmatpush.msra.mxu0 0.0
    %168 = vmatpush.msra.mxu0 0.0
    %169 = vmatpush.msra.mxu0 0.0
    %170 = vmatpush.msra.mxu0 0.0
    %171 = vmatpush.msra.mxu0 0.0
    %172 = vmatpush.msra.mxu0 0.0
    %173 = vmatpush.msra.mxu0 0.0
    %174 = vmatpush.msra.mxu0 0.0
    %175 = vmatpush.msra.mxu0 %v146
    %176 = vmatpush.msra.mxu0 %v145
    %177 = vmatpush.msra.mxu0 %v144
    %178 = vmatpush.msra.mxu0 %v143
    %179 = vmatmul.f32.gmra.mxu0 %v161
    %v180 = vpop.f32.mrf.mxu0
    %v181 = vadd.f32 0.0, %v180
    %182 = vdwg.mxu0
    %v184 = vsel %vm159, %v140, 0
    %186 = vmatpush.msra.mxu0 0.0
    %187 = vmatpush.msra.mxu0 0.0
    %188 = vmatpush.msra.mxu0 0.0
    %189 = vmatpush.msra.mxu0 0.0
    %190 = vmatpush.msra.mxu0 0.0
    %191 = vmatpush.msra.mxu0 0.0
    %192 = vmatpush.msra.mxu0 0.0
    %193 = vmatpush.msra.mxu0 0.0
    %194 = vmatpush.msra.mxu0 0.0
    %195 = vmatpush.msra.mxu0 0.0
    %196 = vmatpush.msra.mxu0 0.0
    %197 = vmatpush.msra.mxu0 0.0
    %198 = vmatpush.msra.mxu0 %v150
    %199 = vmatpush.msra.mxu0 %v149
    %200 = vmatpush.msra.mxu0 %v148
    %201 = vmatpush.msra.mxu0 %v147
    %202 = vmatmul.f32.gmra.mxu0 %v184
    %v203 = vpop.f32.mrf.mxu0
    %v204 = vadd.f32 0.0, %v203
    %205 = vdwg.mxu0
    %v207 = vsel %vm159, %v141, 0
    %209 = vmatpush.msra.mxu0 0.0
    %210 = vmatpush.msra.mxu0 0.0
    %211 = vmatpush.msra.mxu0 0.0
    %212 = vmatpush.msra.mxu0 0.0
    %213 = vmatpush.msra.mxu0 0.0
    %214 = vmatpush.msra.mxu0 0.0
    %215 = vmatpush.msra.mxu0 0.0
    %216 = vmatpush.msra.mxu0 0.0
    %217 = vmatpush.msra.mxu0 0.0
    %218 = vmatpush.msra.mxu0 0.0
    %219 = vmatpush.msra.mxu0 0.0
    %220 = vmatpush.msra.mxu0 0.0
    %221 = vmatpush.msra.mxu0 %v154
    %222 = vmatpush.msra.mxu0 %v153
    %223 = vmatpush.msra.mxu0 %v152
    %224 = vmatpush.msra.mxu0 %v151
    %225 = vmatmul.f32.gmra.mxu0 %v207
    %v226 = vpop.f32.mrf.mxu0
    %v227 = vadd.f32 0.0, %v226
    %228 = vdwg.mxu0
    %v230 = vsel %vm159, %v142, 0
    %232 = vmatpush.msra.mxu0 0.0
    %233 = vmatpush.msra.mxu0 0.0
    %234 = vmatpush.msra.mxu0 0.0
    %235 = vmatpush.msra.mxu0 0.0
    %236 = vmatpush.msra.mxu0 0.0
    %237 = vmatpush.msra.mxu0 0.0
    %238 = vmatpush.msra.mxu0 0.0
    %239 = vmatpush.msra.mxu0 0.0
    %240 = vmatpush.msra.mxu0 0.0
    %241 = vmatpush.msra.mxu0 0.0
    %242 = vmatpush.msra.mxu0 0.0
    %243 = vmatpush.msra.mxu0 0.0
    %244 = vmatpush.msra.mxu0 %v158
    %245 = vmatpush.msra.mxu0 %v157
    %246 = vmatpush.msra.mxu0 %v156
    %247 = vmatpush.msra.mxu0 %v155
    %248 = vmatmul.f32.gmra.mxu0 %v230
    %v249 = vpop.f32.mrf.mxu0
    %v250 = vadd.f32 0.0, %v249
    %251 = vdwg.mxu0
    %v252 = vld [vmem:[%s5] sm:$0xff]
    %v253 = vld [vmem:[%s5 + $0x8] sm:$0xff]
    %v254 = vld [vmem:[%s5 + $0x10] sm:$0xff]
    %v255 = vld [vmem:[%s5 + $0x18] sm:$0xff]
    %v256 = vld [vmem:[%s5 + $0x20] sm:$0xff]
    %v257 = vld [vmem:[%s5 + $0x28] sm:$0xff]
    %v258 = vld [vmem:[%s5 + $0x30] sm:$0xff]
    %v259 = vld [vmem:[%s5 + $0x38] sm:$0xff]
    %v260 = vld [vmem:[%s5 + $0x40] sm:$0xff]
    %v261 = vld [vmem:[%s5 + $0x48] sm:$0xff]
    %v262 = vld [vmem:[%s5 + $0x50] sm:$0xff]
    %v263 = vld [vmem:[%s5 + $0x58] sm:$0xff]
    %v264 = vld [vmem:[%s5 + $0x60] sm:$0xff]
    %v265 = vld [vmem:[%s5 + $0x68] sm:$0xff]
    %v266 = vld [vmem:[%s5 + $0x70] sm:$0xff]
    %v267 = vld [vmem:[%s5 + $0x78] sm:$0xff]
    %268 = vmatpush.msra.mxu0 0.0
    %269 = vmatpush.msra.mxu0 0.0
    %270 = vmatpush.msra.mxu0 0.0
    %271 = vmatpush.msra.mxu0 0.0
    %272 = vmatpush.msra.mxu0 0.0
    %273 = vmatpush.msra.mxu0 0.0
    %274 = vmatpush.msra.mxu0 0.0
    %275 = vmatpush.msra.mxu0 0.0
    %276 = vmatpush.msra.mxu0 0.0
    %277 = vmatpush.msra.mxu0 0.0
    %278 = vmatpush.msra.mxu0 0.0
    %279 = vmatpush.msra.mxu0 0.0
    %280 = vmatpush.msra.mxu0 %v255
    %281 = vmatpush.msra.mxu0 %v254
    %282 = vmatpush.msra.mxu0 %v253
    %283 = vmatpush.msra.mxu0 %v252
    %284 = vmatmul.f32.gmra.mxu0 %v161
    %v285 = vpop.f32.mrf.mxu0
    %v286 = vadd.f32 0.0, %v285
    %287 = vdwg.mxu0
    %288 = vmatpush.msra.mxu0 0.0
    %289 = vmatpush.msra.mxu0 0.0
    %290 = vmatpush.msra.mxu0 0.0
    %291 = vmatpush.msra.mxu0 0.0
    %292 = vmatpush.msra.mxu0 0.0
    %293 = vmatpush.msra.mxu0 0.0
    %294 = vmatpush.msra.mxu0 0.0
    %295 = vmatpush.msra.mxu0 0.0
    %296 = vmatpush.msra.mxu0 0.0
    %297 = vmatpush.msra.mxu0 0.0
    %298 = vmatpush.msra.mxu0 0.0
    %299 = vmatpush.msra.mxu0 0.0
    %300 = vmatpush.msra.mxu0 %v259
    %301 = vmatpush.msra.mxu0 %v258
    %302 = vmatpush.msra.mxu0 %v257
    %303 = vmatpush.msra.mxu0 %v256
    %304 = vmatmul.f32.gmra.mxu0 %v184
    %v305 = vpop.f32.mrf.mxu0
    %v306 = vadd.f32 0.0, %v305
    %307 = vdwg.mxu0
    %308 = vmatpush.msra.mxu0 0.0
    %309 = vmatpush.msra.mxu0 0.0
    %310 = vmatpush.msra.mxu0 0.0
    %311 = vmatpush.msra.mxu0 0.0
    %312 = vmatpush.msra.mxu0 0.0
    %313 = vmatpush.msra.mxu0 0.0
    %314 = vmatpush.msra.mxu0 0.0
    %315 = vmatpush.msra.mxu0 0.0
    %316 = vmatpush.msra.mxu0 0.0
    %317 = vmatpush.msra.mxu0 0.0
    %318 = vmatpush.msra.mxu0 0.0
    %319 = vmatpush.msra.mxu0 0.0
    %320 = vmatpush.msra.mxu0 %v263
    %321 = vmatpush.msra.mxu0 %v262
    %322 = vmatpush.msra.mxu0 %v261
    %323 = vmatpush.msra.mxu0 %v260
    %324 = vmatmul.f32.gmra.mxu0 %v207
    %v325 = vpop.f32.mrf.mxu0
    %v326 = vadd.f32 0.0, %v325
    %327 = vdwg.mxu0
    %328 = vmatpush.msra.mxu0 0.0
    %329 = vmatpush.msra.mxu0 0.0
    %330 = vmatpush.msra.mxu0 0.0
    %331 = vmatpush.msra.mxu0 0.0
    %332 = vmatpush.msra.mxu0 0.0
    %333 = vmatpush.msra.mxu0 0.0
    %334 = vmatpush.msra.mxu0 0.0
    %335 = vmatpush.msra.mxu0 0.0
    %336 = vmatpush.msra.mxu0 0.0
    %337 = vmatpush.msra.mxu0 0.0
    %338 = vmatpush.msra.mxu0 0.0
    %339 = vmatpush.msra.mxu0 0.0
    %340 = vmatpush.msra.mxu0 %v267
    %341 = vmatpush.msra.mxu0 %v266
    %342 = vmatpush.msra.mxu0 %v265
    %343 = vmatpush.msra.mxu0 %v264
    %344 = vmatmul.f32.gmra.mxu0 %v230
    %v345 = vpop.f32.mrf.mxu0
    %v346 = vadd.f32 0.0, %v345
    %347 = vdwg.mxu0
    %v348 = vld [vmem:[%s6] sm:$0xff]
    %v349 = vld [vmem:[%s6 + $0x8] sm:$0xff]
    %v350 = vld [vmem:[%s6 + $0x10] sm:$0xff]
    %v351 = vld [vmem:[%s6 + $0x18] sm:$0xff]
    %v352 = vld [vmem:[%s6 + $0x20] sm:$0xff]
    %v353 = vld [vmem:[%s6 + $0x28] sm:$0xff]
    %v354 = vld [vmem:[%s6 + $0x30] sm:$0xff]
    %v355 = vld [vmem:[%s6 + $0x38] sm:$0xff]
    %v356 = vld [vmem:[%s6 + $0x40] sm:$0xff]
    %v357 = vld [vmem:[%s6 + $0x48] sm:$0xff]
    %v358 = vld [vmem:[%s6 + $0x50] sm:$0xff]
    %v359 = vld [vmem:[%s6 + $0x58] sm:$0xff]
    %v360 = vld [vmem:[%s6 + $0x60] sm:$0xff]
    %v361 = vld [vmem:[%s6 + $0x68] sm:$0xff]
    %v362 = vld [vmem:[%s6 + $0x70] sm:$0xff]
    %v363 = vld [vmem:[%s6 + $0x78] sm:$0xff]
    %364 = vmatpush.msra.mxu0 0.0
    %365 = vmatpush.msra.mxu0 0.0
    %366 = vmatpush.msra.mxu0 0.0
    %367 = vmatpush.msra.mxu0 0.0
    %368 = vmatpush.msra.mxu0 0.0
    %369 = vmatpush.msra.mxu0 0.0
    %370 = vmatpush.msra.mxu0 0.0
    %371 = vmatpush.msra.mxu0 0.0
    %372 = vmatpush.msra.mxu0 0.0
    %373 = vmatpush.msra.mxu0 0.0
    %374 = vmatpush.msra.mxu0 0.0
    %375 = vmatpush.msra.mxu0 0.0
    %376 = vmatpush.msra.mxu0 %v351
    %377 = vmatpush.msra.mxu0 %v350
    %378 = vmatpush.msra.mxu0 %v349
    %379 = vmatpush.msra.mxu0 %v348
    %380 = vmatmul.f32.gmra.mxu0 %v161
    %v381 = vpop.f32.mrf.mxu0
    %v382 = vadd.f32 0.0, %v381
    %383 = vdwg.mxu0
    %384 = vmatpush.msra.mxu0 0.0
    %385 = vmatpush.msra.mxu0 0.0
    %386 = vmatpush.msra.mxu0 0.0
    %387 = vmatpush.msra.mxu0 0.0
    %388 = vmatpush.msra.mxu0 0.0
    %389 = vmatpush.msra.mxu0 0.0
    %390 = vmatpush.msra.mxu0 0.0
    %391 = vmatpush.msra.mxu0 0.0
    %392 = vmatpush.msra.mxu0 0.0
    %393 = vmatpush.msra.mxu0 0.0
    %394 = vmatpush.msra.mxu0 0.0
    %395 = vmatpush.msra.mxu0 0.0
    %396 = vmatpush.msra.mxu0 %v355
    %397 = vmatpush.msra.mxu0 %v354
    %398 = vmatpush.msra.mxu0 %v353
    %399 = vmatpush.msra.mxu0 %v352
    %400 = vmatmul.f32.gmra.mxu0 %v184
    %v401 = vpop.f32.mrf.mxu0
    %v402 = vadd.f32 0.0, %v401
    %403 = vdwg.mxu0
    %404 = vmatpush.msra.mxu0 0.0
    %405 = vmatpush.msra.mxu0 0.0
    %406 = vmatpush.msra.mxu0 0.0
    %407 = vmatpush.msra.mxu0 0.0
    %408 = vmatpush.msra.mxu0 0.0
    %409 = vmatpush.msra.mxu0 0.0
    %410 = vmatpush.msra.mxu0 0.0
    %411 = vmatpush.msra.mxu0 0.0
    %412 = vmatpush.msra.mxu0 0.0
    %413 = vmatpush.msra.mxu0 0.0
    %414 = vmatpush.msra.mxu0 0.0
    %415 = vmatpush.msra.mxu0 0.0
    %416 = vmatpush.msra.mxu0 %v359
    %417 = vmatpush.msra.mxu0 %v358
    %418 = vmatpush.msra.mxu0 %v357
    %419 = vmatpush.msra.mxu0 %v356
    %420 = vmatmul.f32.gmra.mxu0 %v207
    %v421 = vpop.f32.mrf.mxu0
    %v422 = vadd.f32 0.0, %v421
    %423 = vdwg.mxu0
    %424 = vmatpush.msra.mxu0 0.0
    %425 = vmatpush.msra.mxu0 0.0
    %426 = vmatpush.msra.mxu0 0.0
    %427 = vmatpush.msra.mxu0 0.0
    %428 = vmatpush.msra.mxu0 0.0
    %429 = vmatpush.msra.mxu0 0.0
    %430 = vmatpush.msra.mxu0 0.0
    %431 = vmatpush.msra.mxu0 0.0
    %432 = vmatpush.msra.mxu0 0.0
    %433 = vmatpush.msra.mxu0 0.0
    %434 = vmatpush.msra.mxu0 0.0
    %435 = vmatpush.msra.mxu0 0.0
    %436 = vmatpush.msra.mxu0 %v363
    %437 = vmatpush.msra.mxu0 %v362
    %438 = vmatpush.msra.mxu0 %v361
    %439 = vmatpush.msra.mxu0 %v360
    %440 = vmatmul.f32.gmra.mxu0 %v230
    %v441 = vpop.f32.mrf.mxu0
    %v442 = vadd.f32 0.0, %v441
    %443 = vdwg.mxu0
    %v444 = vmul.f32 %v181, %v286
    %v445 = vmul.f32 %v204, %v306
    %v446 = vmul.f32 %v227, %v326
    %v447 = vmul.f32 %v250, %v346
    %vm448 = vcmask 57344
    %v449 = vsel %vm448, %v444, 0.0
    %450 = vadd.xlane.f32.xlu0 %v449
    %v451 = vpop.xlane.xlu0 %450
    %v452 = vsel %vm448, %v445, 0.0
    %453 = vadd.xlane.f32.xlu0 %v452
    %v454 = vpop.xlane.xlu0 %453
    %v455 = vsel %vm448, %v446, 0.0
    %456 = vadd.xlane.f32.xlu0 %v455
    %v457 = vpop.xlane.xlu0 %456
    %v458 = vsel %vm448, %v447, 0.0
    %459 = vadd.xlane.f32.xlu0 %v458
    %v460 = vpop.xlane.xlu0 %459
    %v461 = vmul.f32 %v451, 0.35355338
    %v462 = vmul.f32 %v454, 0.35355338
    %v463 = vmul.f32 %v457, 0.35355338
    %v464 = vmul.f32 %v460, 0.35355338
    %v465 = vsub.f32 %v461, %v461
    %v466 = vsub.f32 %v462, %v462
    %v467 = vsub.f32 %v463, %v463
    %v468 = vsub.f32 %v464, %v464
    %v469 = vmul.f32 %v465, 1.442695
    %v470 = vpow.pop %v469
    %v471 = vmul.f32 %v466, 1.442695
    %v472 = vpow.pop %v471
    %v473 = vmul.f32 %v467, 1.442695
    %v474 = vpow.pop %v473
    %v475 = vmul.f32 %v468, 1.442695
    %v476 = vpow.pop %v475
    %v477 = vadd.f32 %v470, 0.0
    %v478 = vadd.f32 %v472, 0.0
    %v479 = vadd.f32 %v474, 0.0
    %v480 = vadd.f32 %v476, 0.0
    %v481 = vrcp.pop %v477
    %v482 = vmul.f32 %v477, %v481
    %v483 = vsub.f32 1.0, %v482
    %v484 = vmul.f32 %v481, %v483
    %v485 = vadd.f32 %v481, %v484
    %vm486 = vweird.f32 %v477
    %vm487 = vweird.f32 %v481
    %vm488 = vmor %vm486, %vm487
    %v489 = vsel %vm488, %v481, %v485
    %v490 = vand.u32 2147483647, %v477
    %vm491 = vcmp.eq.f32.partialorder %v490, 8.507059e+37
    %v492 = vand.u32 %v477, 2147483648
    %v493 = vor.u32 1.1754944e-38, %v492
    %v494 = vsel %vm491, %v493, %v489
    %v495 = vmul.f32 %v470, %v494
    %v496 = vrcp.pop %v478
    %v497 = vmul.f32 %v478, %v496
    %v498 = vsub.f32 1.0, %v497
    %v499 = vmul.f32 %v496, %v498
    %v500 = vadd.f32 %v496, %v499
    %vm501 = vweird.f32 %v478
    %vm502 = vweird.f32 %v496
    %vm503 = vmor %vm501, %vm502
    %v504 = vsel %vm503, %v496, %v500
    %v505 = vand.u32 2147483647, %v478
    %vm506 = vcmp.eq.f32.partialorder %v505, 8.507059e+37
    %v507 = vand.u32 %v478, 2147483648
    %v508 = vor.u32 1.1754944e-38, %v507
    %v509 = vsel %vm506, %v508, %v504
    %v510 = vmul.f32 %v472, %v509
    %v511 = vrcp.pop %v479
    %v512 = vmul.f32 %v479, %v511
    %v513 = vsub.f32 1.0, %v512
    %v514 = vmul.f32 %v511, %v513
    %v515 = vadd.f32 %v511, %v514
    %vm516 = vweird.f32 %v479
    %vm517 = vweird.f32 %v511
    %vm518 = vmor %vm516, %vm517
    %v519 = vsel %vm518, %v511, %v515
    %v520 = vand.u32 2147483647, %v479
    %vm521 = vcmp.eq.f32.partialorder %v520, 8.507059e+37
    %v522 = vand.u32 %v479, 2147483648
    %v523 = vor.u32 1.1754944e-38, %v522
    %v524 = vsel %vm521, %v523, %v519
    %v525 = vmul.f32 %v474, %v524
    %v526 = vrcp.pop %v480
    %v527 = vmul.f32 %v480, %v526
    %v528 = vsub.f32 1.0, %v527
    %v529 = vmul.f32 %v526, %v528
    %v530 = vadd.f32 %v526, %v529
    %vm531 = vweird.f32 %v480
    %vm532 = vweird.f32 %v526
    %vm533 = vmor %vm531, %vm532
    %v534 = vsel %vm533, %v526, %v530
    %v535 = vand.u32 2147483647, %v480
    %vm536 = vcmp.eq.f32.partialorder %v535, 8.507059e+37
    %v537 = vand.u32 %v480, 2147483648
    %v538 = vor.u32 1.1754944e-38, %v537
    %v539 = vsel %vm536, %v538, %v534
    %v540 = vmul.f32 %v476, %v539
    %v541 = vmul.f32 %v495, %v382
    %v542 = vmul.f32 %v510, %v402
    %v543 = vmul.f32 %v525, %v422
    %v544 = vmul.f32 %v540, %v442
    %v545 = vld [vmem:[%s7] sm:$0xff]
    %v546 = vld [vmem:[%s7 + $0x8] sm:$0xff]
    %v547 = vld [vmem:[%s7 + $0x10] sm:$0xff]
    %v548 = vld [vmem:[%s7 + $0x18] sm:$0xff]
    %vm549 = vcmask 64512
    %v551 = vsel %vm549, %v541, 0
    %553 = vmatpush.msra.mxu0 0.0
    %554 = vmatpush.msra.mxu0 0.0
    %555 = vmatpush.msra.mxu0 0.0
    %556 = vmatpush.msra.mxu0 0.0
    %557 = vmatpush.msra.mxu0 0.0
    %558 = vmatpush.msra.mxu0 0.0
    %559 = vmatpush.msra.mxu0 0.0
    %560 = vmatpush.msra.mxu0 0.0
    %561 = vmatpush.msra.mxu0 0.0
    %562 = vmatpush.msra.mxu0 0.0
    %563 = vmatpush.msra.mxu0 0.0
    %564 = vmatpush.msra.mxu0 0.0
    %565 = vmatpush.msra.mxu0 0.0
    %566 = vmatpush.msra.mxu0 0.0
    %567 = vmatpush.msra.mxu0 0.0
    %568 = vmatpush.msra.mxu0 %v545
    %569 = vmatmul.f32.gmra.mxu0 %v551
    %v570 = vpop.f32.mrf.mxu0
    %v571 = vadd.f32 0.0, %v570
    %572 = vdwg.mxu0
    %v574 = vsel %vm549, %v542, 0
    %576 = vmatpush.msra.mxu0 0.0
    %577 = vmatpush.msra.mxu0 0.0
    %578 = vmatpush.msra.mxu0 0.0
    %579 = vmatpush.msra.mxu0 0.0
    %580 = vmatpush.msra.mxu0 0.0
    %581 = vmatpush.msra.mxu0 0.0
    %582 = vmatpush.msra.mxu0 0.0
    %583 = vmatpush.msra.mxu0 0.0
    %584 = vmatpush.msra.mxu0 0.0
    %585 = vmatpush.msra.mxu0 0.0
    %586 = vmatpush.msra.mxu0 0.0
    %587 = vmatpush.msra.mxu0 0.0
    %588 = vmatpush.msra.mxu0 0.0
    %589 = vmatpush.msra.mxu0 0.0
    %590 = vmatpush.msra.mxu0 0.0
    %591 = vmatpush.msra.mxu0 %v546
    %592 = vmatmul.f32.gmra.mxu0 %v574
    %v593 = vpop.f32.mrf.mxu0
    %v594 = vadd.f32 0.0, %v593
    %595 = vdwg.mxu0
    %v597 = vsel %vm549, %v543, 0
    %599 = vmatpush.msra.mxu0 0.0
    %600 = vmatpush.msra.mxu0 0.0
    %601 = vmatpush.msra.mxu0 0.0
    %602 = vmatpush.msra.mxu0 0.0
    %603 = vmatpush.msra.mxu0 0.0
    %604 = vmatpush.msra.mxu0 0.0
    %605 = vmatpush.msra.mxu0 0.0
    %606 = vmatpush.msra.mxu0 0.0
    %607 = vmatpush.msra.mxu0 0.0
    %608 = vmatpush.msra.mxu0 0.0
    %609 = vmatpush.msra.mxu0 0.0
    %610 = vmatpush.msra.mxu0 0.0
    %611 = vmatpush.msra.mxu0 0.0
    %612 = vmatpush.msra.mxu0 0.0
    %613 = vmatpush.msra.mxu0 0.0
    %614 = vmatpush.msra.mxu0 %v547
    %615 = vmatmul.f32.gmra.mxu0 %v597
    %v616 = vpop.f32.mrf.mxu0
    %v617 = vadd.f32 0.0, %v616
    %618 = vdwg.mxu0
    %v620 = vsel %vm549, %v544, 0
    %622 = vmatpush.msra.mxu0 0.0
    %623 = vmatpush.msra.mxu0 0.0
    %624 = vmatpush.msra.mxu0 0.0
    %625 = vmatpush.msra.mxu0 0.0
    %626 = vmatpush.msra.mxu0 0.0
    %627 = vmatpush.msra.mxu0 0.0
    %628 = vmatpush.msra.mxu0 0.0
    %629 = vmatpush.msra.mxu0 0.0
    %630 = vmatpush.msra.mxu0 0.0
    %631 = vmatpush.msra.mxu0 0.0
    %632 = vmatpush.msra.mxu0 0.0
    %633 = vmatpush.msra.mxu0 0.0
    %634 = vmatpush.msra.mxu0 0.0
    %635 = vmatpush.msra.mxu0 0.0
    %636 = vmatpush.msra.mxu0 0.0
    %637 = vmatpush.msra.mxu0 %v548
    %638 = vmatmul.f32.gmra.mxu0 %v620
    %v639 = vpop.f32.mrf.mxu0
    %v640 = vadd.f32 0.0, %v639
    %641 = vdwg.mxu0
    %vm642 = vcmask 524288
    %v643 = vsel %vm642, %v571, 0.0
    %v644 = vsel %vm642, %v594, 0.0
    %v645 = vadd.f32 %v643, %v644
    %v646 = vsel %vm642, %v617, 0.0
    %v647 = vadd.f32 %v645, %v646
    %v648 = vsel %vm642, %v640, 0.0
    %v649 = vadd.f32 %v647, %v648
    %v650 = vld [vmem:[%s8] sm:$0x1]
    %v651 = vadd.f32 %v649, %v650
    %652 = vst.msk [vmem:[#allocation6] sm:$0x1] %vm642, %v651
    // Predicated region
    $region34: #{tpu_custom_call.1} parent=1 // pred_check
      _
    $region35: #{tpu_custom_call.1} parent=1 // pred_check_branch
      %654 = sbr.rel (0) target = $region37
    $region36: #{tpu_custom_call.1} parent=1 // pred_region
      %656 = vsyncadd [#allocation5], 0
      %s657 = sshll.u32 [#allocation4], 4
      %s658 = int_to_ptr.vmem [resolvable:$true] %s657
      %s659 = sshll.u32 %s9, 4
      %s660 = int_to_ptr.hbm [resolvable:$true] %s659
      %665 = dma.vmem_to_hbm [thread:$0]  %s658, 256, %s660, [#allocation5], 128, 128, 8
    $region37: #{tpu_custom_call.1} parent=1 // pred_fallthru
      _
    // Predicated region
    $region38: #{tpu_custom_call.1} parent=1 // pred_check
      _
    $region39: #{tpu_custom_call.1} parent=1 // pred_check_branch
      %667 = sbr.rel (0) target = $region41
    $region40: #{tpu_custom_call.1} parent=1 // pred_region
      %669 = vsyncadd [#allocation7], 0
      %s671 = sshll.u32 [#allocation6], 4
      %s672 = int_to_ptr.vmem [resolvable:$true] %s671
      %s673 = sshll.u32 %s10, 4
      %s674 = int_to_ptr.hbm [resolvable:$true] %s673
      %676 = dma.vmem_to_hbm [thread:$0]  %s672, 16, %s674, [#allocation7]
    $region41: #{tpu_custom_call.1} parent=1 // pred_fallthru
      _
    // Predicated region
    $region42: #{tpu_custom_call.1} parent=1 // pred_check
      _
    $region43: #{tpu_custom_call.1} parent=1 // pred_check_branch
      %678 = sbr.rel (0) target = $region45
    $region44: #{tpu_custom_call.1} parent=1 // pred_region
      %680 = dma.done [#allocation5], 256
    $region45: #{tpu_custom_call.1} parent=1 // pred_fallthru
      _
    // Predicated region
    $region46: #{tpu_custom_call.1} parent=1 // pred_check
      _
    $region47: #{tpu_custom_call.1} parent=1 // pred_check_branch
      %682 = sbr.rel (0) target = $region49
    $region48: #{tpu_custom_call.1} parent=1 // pred_region
      %684 = dma.done [#allocation7], 16
    $region49: #{tpu_custom_call.1} parent=1 // pred_fallthru
      _
    %685 = vsyncpa [#allocation5], 1
    %686 = vsyncpa [#allocation7], 1

</llo_original>
